<compile_context>
chip_gen: v5e
topology: v5e:2x2
jax: 0.10.0
libtpu: 0.0.40
codegen_flags: <defaults>
</compile_context>

<pallas_src>
import math
import functools

import jax
import jax.numpy as jnp
from jax.experimental import pallas as pl
from jax.experimental.pallas import tpu as pltpu

EPS = 1e-10
LANE = 128
PAD_NEG = -100.0                      # elu(-100)+1 ~ 3.7e-44 -> padded rows/cols ~ 0
H_RESIDENT_MAX_BYTES = 8 * 1024 * 1024


def _vmem_limit_bytes():
    # ~48 MiB on v7x (64 MiB physical), ~96 MiB on v5e/v6e (128 MiB physical).
    try:
        cap = int(getattr(pltpu.get_tpu_info(), "vmem_capacity_bytes"))
    except Exception:
        cap = 64 * 1024 * 1024
    return max(32 * 1024 * 1024, min(cap * 3 // 4, 96 * 1024 * 1024))


VMEM_LIMIT_BYTES = _vmem_limit_bytes()


def _round_up(x, m):
    return ((x + m - 1) // m) * m


def _pick_tile(n):
    # 512 reaches ~85% of HBM roofline; never fall back to a whole-array block.
    for t in (512, 256, 128):
        if n >= t:
            return t
    return n            # tiny graph: single block, trivially fits VMEM


def _elu1(p):
    # elu(p) + 1 == p + 1 (p > 0) else exp(p); clamp keeps the unselected exp
    # branch finite for large positive p.
    return jnp.where(p > 0, p + 1.0, jnp.exp(jnp.minimum(p, 0.0)))


# ----------------------------------------------------------------------------
# Pass 1: row-sum + partial column-sum of elu(P)+1 with a SINGLE read of P.
#   deg = 0.5 * (rowsum + colsum) computed in O(N) glue afterwards.
# ----------------------------------------------------------------------------
def _deg_kernel(p_ref, rowsum_ref, pcol_ref):
    j = pl.program_id(1)

    @pl.when(j == 0)
    def _():
        rowsum_ref[...] = jnp.zeros_like(rowsum_ref)

    a = _elu1(p_ref[...])
    rowsum_ref[...] += jnp.sum(a, axis=1, keepdims=True)          # reduce over j (last axis)
    pcol_ref[...] = jnp.sum(a, axis=0, keepdims=True)[None]       # partial col-sum (1,1,t)


# ----------------------------------------------------------------------------
# Pass 2: per-tile symmetrize + 'sym' normalize with precomputed d_inv (one transpose).
# Dual-dtype output: f32 (module's returned Adj_) + bf16 (fed to the layer matmuls).
# ----------------------------------------------------------------------------
def _adj_norm_kernel(p_ij_ref, p_ji_ref, dinv_i_ref, dinv_j_ref,
                     adj_f32_ref, adj_bf16_ref):
    a_ij = _elu1(p_ij_ref[...])
    a_ji = _elu1(p_ji_ref[...])
    # out = d_inv[i] * 0.5*(A[i,j] + A[j,i]^T) * d_inv[j]  -- single in-tile transpose,
    # no per-tile sqrt / divide (d_inv is precomputed once in glue).
    out = (0.5 * dinv_i_ref[...]) * (a_ij + a_ji.T) * dinv_j_ref[...]
    adj_f32_ref[...] = out
    adj_bf16_ref[...] = out.astype(jnp.bfloat16)


def normalize_adj(adj_param, tile):
    n = adj_param.shape[0]
    t = tile
    g = n // t

    rowsum, pcol = pl.pallas_call(
        _deg_kernel,
        out_shape=(jax.ShapeDtypeStruct((n, 1), jnp.float32),
                   jax.ShapeDtypeStruct((g, 1, n), jnp.float32)),
        grid=(g, g),
        in_specs=[pl.BlockSpec((t, t), lambda i, j: (i, j))],
        out_specs=(pl.BlockSpec((t, 1), lambda i, j: (i, 0)),
                   pl.BlockSpec((1, 1, t), lambda i, j: (i, 0, j))),
        compiler_params=pltpu.CompilerParams(
            dimension_semantics=("parallel", "arbitrary"),
            vmem_limit_bytes=VMEM_LIMIT_BYTES),
    )(adj_param)

    # O(g*N) glue: combine row/col sums; d_inv computed ONCE, passed in two layouts.
    deg = 0.5 * (rowsum[:, 0] + jnp.sum(pcol, axis=(0, 1)))       # (n,)
    d_inv = 1.0 / (jnp.sqrt(deg) + EPS)
    d_inv_col = d_inv[:, None]                                    # (n, 1)
    d_inv_row = d_inv[None, :]                                    # (1, n)

    adj_f32, adj_bf16 = pl.pallas_call(
        _adj_norm_kernel,
        out_shape=(jax.ShapeDtypeStruct((n, n), jnp.float32),
                   jax.ShapeDtypeStruct((n, n), jnp.bfloat16)),
        grid=(g, g),
        in_specs=[pl.BlockSpec((t, t), lambda i, j: (i, j)),
                  pl.BlockSpec((t, t), lambda i, j: (j, i)),
                  pl.BlockSpec((t, 1), lambda i, j: (i, 0)),
                  pl.BlockSpec((1, t), lambda i, j: (0, j))],
        out_specs=(pl.BlockSpec((t, t), lambda i, j: (i, j)),
                   pl.BlockSpec((t, t), lambda i, j: (i, j))),
        compiler_params=pltpu.CompilerParams(
            dimension_semantics=("parallel", "parallel"),
            vmem_limit_bytes=VMEM_LIMIT_BYTES),
    )(adj_param, adj_param, d_inv_col, d_inv_row)
    # TODO(synk): upper-triangle-only pass 2 (mirrored tile via manual DMA) would halve
    # P reads again; for nlayers == 1 pass 2 could be fused into the first spmm; an fp8
    # adjacency copy for v7x's MXU is another possible win -- all left out for clarity.
    return adj_f32, adj_bf16


# ----------------------------------------------------------------------------
# GCN layer = linear (xW + b, bf16 MXU inputs, f32 accumulate) + tiled A @ H
# ----------------------------------------------------------------------------
def _linear_kernel(x_ref, w_ref, b_ref, h_ref):
    h = jnp.dot(x_ref[...], w_ref[...],
                preferred_element_type=jnp.float32) + b_ref[...]
    h_ref[...] = h.astype(h_ref.dtype)


def linear_bf16(x, w, b, tile):
    n, f_in = x.shape
    f_out = w.shape[1]
    return pl.pallas_call(
        _linear_kernel,
        out_shape=jax.ShapeDtypeStruct((n, f_out), jnp.bfloat16),
        grid=(n // tile,),
        in_specs=[pl.BlockSpec((tile, f_in), lambda i: (i, 0)),
                  pl.BlockSpec((f_in, f_out), lambda i: (0, 0)),
                  pl.BlockSpec((1, f_out), lambda i: (0, 0))],
        out_specs=pl.BlockSpec((tile, f_out), lambda i: (i, 0)),
        compiler_params=pltpu.CompilerParams(
            dimension_semantics=("parallel",),
            vmem_limit_bytes=VMEM_LIMIT_BYTES),
    )(x, w, b)


def _spmm_kernel(a_ref, h_ref, o_ref, acc_ref, *, apply_relu, tile, h_resident):
    k = pl.program_id(1)

    @pl.when(k == 0)
    def _():
        acc_ref[...] = jnp.zeros_like(acc_ref)

    if h_resident:
        hk = h_ref[pl.ds(pl.multiple_of(k * tile, tile), tile), :]
    else:
        hk = h_ref[...]
    acc_ref[...] += jnp.dot(a_ref[...], hk, preferred_element_type=jnp.float32)

    @pl.when(k == pl.num_programs(1) - 1)
    def _():
        y = acc_ref[...]
        if apply_relu:
            y = jnp.maximum(y, 0.0)
        o_ref[...] = y.astype(o_ref.dtype)


def adj_matmul(adj_bf16, h, *, apply_relu, out_dtype, tile):
    n = adj_bf16.shape[0]
    f_out = h.shape[1]
    g = n // tile
    # Keep H fully VMEM-resident (constant index_map -> DMA'd exactly once) when small;
    # the k loop then only streams A tiles.  Fall back to per-tile H streaming otherwise.
    h_resident = n * f_out * h.dtype.itemsize <= H_RESIDENT_MAX_BYTES
    if h_resident:
        h_spec = pl.BlockSpec((n, f_out), lambda i, k: (0, 0))
    else:
        h_spec = pl.BlockSpec((tile, f_out), lambda i, k: (k, 0))
    kern = functools.partial(_spmm_kernel, apply_relu=apply_relu,
                             tile=tile, h_resident=h_resident)
    return pl.pallas_call(
        kern,
        out_shape=jax.ShapeDtypeStruct((n, f_out), out_dtype),
        grid=(g, g),
        in_specs=[pl.BlockSpec((tile, tile), lambda i, k: (i, k)),
                  h_spec],
        out_specs=pl.BlockSpec((tile, f_out), lambda i, k: (i, 0)),
        scratch_shapes=[pltpu.VMEM((tile, f_out), jnp.float32)],
        compiler_params=pltpu.CompilerParams(
            dimension_semantics=("parallel", "arbitrary"),
            vmem_limit_bytes=VMEM_LIMIT_BYTES),
    )(adj_bf16, h)


# ----------------------------------------------------------------------------
# Parameter setup (plain-JAX glue, deterministic, one-time)
# ----------------------------------------------------------------------------
def init_gcn_params(key, in_dim, hidden_dim, num_classes, nlayers):
    """nn.Linear-style uniform(-1/sqrt(fan_in), 1/sqrt(fan_in)) init per layer."""
    dims = [in_dim] + [hidden_dim] * (nlayers - 1) + [num_classes]
    params = []
    for li in range(nlayers):
        key, kw, kb = jax.random.split(key, 3)
        bound = 1.0 / math.sqrt(dims[li])
        w = jax.random.uniform(kw, (dims[li], dims[li + 1]), jnp.float32,
                               -bound, bound)
        b = jax.random.uniform(kb, (1, dims[li + 1]), jnp.float32,
                               -bound, bound)
        params.append((w, b))
    return params


def prepare_layer_params(layer_params, in_dim):
    """One-time lane padding of W/b to 128-wide outputs + bf16 cast of W.
    Done at init so the forward has no per-call host-side pad ops."""
    prepared = []
    cur_in = in_dim
    for (w, b) in layer_params:
        out_pad = _round_up(w.shape[1], LANE)
        w_p = jnp.pad(w, ((0, cur_in - w.shape[0]), (0, out_pad - w.shape[1])))
        b_p = jnp.pad(b, ((0, 0), (0, out_pad - b.shape[1])))
        prepared.append((w_p.astype(jnp.bfloat16), b_p))     # bias kept f32
        cur_in = out_pad
    return prepared


def fp_adj_param(features, k, i_):
    """FullParam learner init: CosineSimilarity -> KNNSparsify(k) -> Discretize
    -> LinearTransform(i).  Done once at __init__ time (glue)."""
    norm = jnp.linalg.norm(features, axis=1, keepdims=True) + EPS
    fn = features / norm
    sim = fn @ fn.T
    thresh = jnp.sort(sim, axis=1)[:, -k][:, None]
    adj = jnp.where(sim >= thresh, sim, 0.0)
    adj = jnp.where(adj > 0, 1.0, 0.0)
    return adj * float(i_) - float(i_)


# ----------------------------------------------------------------------------
# GCN_DAE forward
# ----------------------------------------------------------------------------
def gcn_dae_forward(adj_param, prepared_params, x, num_classes, tile=None):
    n = x.shape[0]
    t = tile or _pick_tile(n)
    n_pad = _round_up(n, t)
    if n_pad != n:
        # Pad P with a large negative so elu(p)+1 ~ 0: degrees / Adj_ are unaffected.
        adj_param = jnp.pad(adj_param, ((0, n_pad - n), (0, n_pad - n)),
                            constant_values=PAD_NEG)
        x = jnp.pad(x, ((0, n_pad - n), (0, 0)))

    adj_f32, adj_bf16 = normalize_adj(adj_param, t)
    # TODO(synk): dropout_adj / feature dropout are identity here (eval mode);
    # training-mode Bernoulli masks are not implemented.
    h = x.astype(jnp.bfloat16)
    nlayers = len(prepared_params)
    for li, (w, b) in enumerate(prepared_params):
        hh = linear_bf16(h, w, b, t)                     # bf16 (n_pad, out_pad)
        last = li == nlayers - 1
        h = adj_matmul(adj_bf16, hh,
                       apply_relu=not last,
                       out_dtype=jnp.float32 if last else jnp.bfloat16,
                       tile=t)
    return h[:n, :num_classes], adj_f32[:n, :n]


# ----------------------------------------------------------------------------
if __name__ == "__main__":
    # small shapes consistent with the module's forward (exercises 2x2 tile grids)
    N_NODES = 256         # features.shape[0]
    IN_DIM = 32
    HIDDEN = 32
    NUM_CLASSES = 8
    NLAYERS = 2
    K = 8                 # kNN sparsify
    I_ = 6.0              # LinearTransform / elu scaling constant
    TILE = 128

    root = jax.random.PRNGKey(0)
    k_feat, k_x, k_par = jax.random.split(root, 3)

    features = jax.random.normal(k_feat, (N_NODES, IN_DIM), jnp.float32)
    # x = (possibly noised) features fed to the denoising GCN
    x = features + 0.1 * jax.random.normal(k_x, (N_NODES, IN_DIM), jnp.float32)

    adj_param = fp_adj_param(features, K, I_)
    layer_params = init_gcn_params(k_par, IN_DIM, HIDDEN, NUM_CLASSES, NLAYERS)
    prepared = prepare_layer_params(layer_params, IN_DIM)

    out, adj_ = gcn_dae_forward(adj_param, prepared, x, NUM_CLASSES, tile=TILE)
    out = jax.block_until_ready(out)
    adj_ = jax.block_until_ready(adj_)

    assert out.shape == (N_NODES, NUM_CLASSES)
    assert adj_.shape == (N_NODES, N_NODES)
    assert bool(jnp.all(jnp.isfinite(out))) and bool(jnp.all(jnp.isfinite(adj_)))
    print("KERNEL_OK")
</pallas_src>

<mosaic_0001>
module attributes {stable_mosaic.version = 11 : i64} {
  func.func @_deg_kernel(%arg0: i32, %arg1: i32, %arg2: memref<128x128xf32, #tpu.memory_space<vmem>>, %arg3: memref<128x1xf32, #tpu.memory_space<vmem>>, %arg4: memref<1x1x128xf32, #tpu.memory_space<vmem>>) attributes {dimension_semantics = [#tpu.dimension_semantics<parallel>, #tpu.dimension_semantics<arbitrary>], iteration_bounds = array<i64: 2, 2>, scalar_prefetch = 0 : i64, scratch_operands = 0 : i64, tpu.core_type = #tpu.core_type<tc>, window_params = [{transform_indices = @transform_0, window_bounds = array<i64: 128, 128>}, {transform_indices = @transform_1, window_bounds = array<i64: 128, 1>}, {transform_indices = @transform_2, window_bounds = array<i64: 1, 1, 128>}]} {
    %c0_i32 = arith.constant 0 : i32
    %0 = arith.cmpi eq, %arg1, %c0_i32 : i32
    %1 = arith.extui %0 : i1 to i32
    %c0_i32_0 = arith.constant 0 : i32
    %2 = arith.cmpi ne, %1, %c0_i32_0 : i32
    scf.if %2 {
      %cst_13 = arith.constant 0.000000e+00 : f32
      %21 = vector.broadcast %cst_13 : f32 to vector<128x1xf32>
      %c0_14 = arith.constant 0 : index
      %c0_15 = arith.constant 0 : index
      %22 = vector.load %arg3[%c0_14, %c0_15] : memref<128x1xf32, #tpu.memory_space<vmem>>, vector<128x1xf32>
      tpu.vector_store %arg3[%c0_14, %c0_15], %21 {strides = array<i32>} : memref<128x1xf32, #tpu.memory_space<vmem>>, vector<128x1xf32>,
    } else {
    }
    %c0 = arith.constant 0 : index
    %c0_1 = arith.constant 0 : index
    %3 = vector.load %arg2[%c0, %c0_1] : memref<128x128xf32, #tpu.memory_space<vmem>>, vector<128x128xf32>
    %cst = arith.constant 0.000000e+00 : f32
    %4 = vector.broadcast %cst : f32 to vector<128x128xf32>
    %5 = arith.cmpf ogt, %3, %4 : vector<128x128xf32>
    %cst_2 = arith.constant 1.000000e+00 : f32
    %6 = vector.broadcast %cst_2 : f32 to vector<128x128xf32>
    %7 = arith.addf %3, %6 : vector<128x128xf32>
    %cst_3 = arith.constant 0.000000e+00 : f32
    %8 = vector.broadcast %cst_3 : f32 to vector<128x128xf32>
    %9 = arith.minimumf %3, %8 : vector<128x128xf32>
    %10 = math.exp %9 : vector<128x128xf32>
    %11 = arith.select %5, %7, %10 : vector<128x128xi1>, vector<128x128xf32>
    %c0_4 = arith.constant 0 : index
    %c0_5 = arith.constant 0 : index
    %12 = vector.load %arg3[%c0_4, %c0_5] : memref<128x1xf32, #tpu.memory_space<vmem>>, vector<128x1xf32>
    %cst_6 = arith.constant dense<0.000000e+00> : vector<128xf32>
    %13 = vector.multi_reduction <add>, %11, %cst_6 [1] : vector<128x128xf32> to vector<128xf32>
    %14 = vector.shape_cast %13 : vector<128xf32> to vector<128x1xf32>
    %15 = arith.addf %12, %14 : vector<128x1xf32>
    %c0_7 = arith.constant 0 : index
    %c0_8 = arith.constant 0 : index
    %16 = vector.load %arg3[%c0_7, %c0_8] : memref<128x1xf32, #tpu.memory_space<vmem>>, vector<128x1xf32>
    tpu.vector_store %arg3[%c0_7, %c0_8], %15 {strides = array<i32>} : memref<128x1xf32, #tpu.memory_space<vmem>>, vector<128x1xf32>,
    %cst_9 = arith.constant dense<0.000000e+00> : vector<128xf32>
    %17 = vector.multi_reduction <add>, %11, %cst_9 [0] : vector<128x128xf32> to vector<128xf32>
    %18 = vector.shape_cast %17 : vector<128xf32> to vector<1x128xf32>
    %19 = vector.shape_cast %18 : vector<1x128xf32> to vector<1x1x128xf32>
    %c0_10 = arith.constant 0 : index
    %c0_11 = arith.constant 0 : index
    %c0_12 = arith.constant 0 : index
    %20 = vector.load %arg4[%c0_10, %c0_11, %c0_12] : memref<1x1x128xf32, #tpu.memory_space<vmem>>, vector<1x1x128xf32>
    tpu.vector_store %arg4[%c0_10, %c0_11, %c0_12], %19 {strides = array<i32>} : memref<1x1x128xf32, #tpu.memory_space<vmem>>, vector<1x1x128xf32>,
    return
  }
  func.func @transform_0(%arg0: i32, %arg1: i32) -> (i32, i32) {
    %c0_i32 = arith.constant 0 : i32
    return %arg0, %arg1 : i32, i32
  }
  func.func @transform_1(%arg0: i32, %arg1: i32) -> (i32, i32) {
    %c0_i32 = arith.constant 0 : i32
    %c0_i32_0 = arith.constant 0 : i32
    return %arg0, %c0_i32 : i32, i32
  }
  func.func @transform_2(%arg0: i32, %arg1: i32) -> (i32, i32, i32) {
    %c0_i32 = arith.constant 0 : i32
    %c0_i32_0 = arith.constant 0 : i32
    return %arg0, %c0_i32, %arg1 : i32, i32, i32
  }
}

</mosaic_0001>

<llo_original>
// kernel: tpu_custom_call.1
$region0: #{tpu_custom_call.1}
  #allocation0 [shape = 'u32[]', space=smem, size = 0x4, offset = 0x4, fixed_abs, tag = 'smem constant byte address 0x4 - core index']
  #allocation1 [shape = 'u32[72,128]{1,0:T(1,128)}', space=vmem, size = 0x9000, scoped, tag = 'internal scratch']
  %s0 = inlined_call_operand.hbm [shape: f32[256,256], index: 0, kind: input, shape index: {}]
  %s1 = inlined_call_operand.vmem [shape: f32[256,1], index: 1, kind: output, shape index: {0}]
  %s2 = inlined_call_operand.hbm [shape: f32[2,1,256], index: 2, kind: output, shape index: {1}]
  %3 = xla_tuple %s1, %s2
  %s4 = sld [smem:[#allocation0]]
  $region53: #{tpu_custom_call.1} parent=0
    _
  %s6 = ssub.s32 1, %s4
  %s7 = scalar_select 0, %s6, %s4
  $region1: #{tpu_custom_call.1} parent=0
    #allocation2 [shape = 'u8[131072]{0}', space=vmem, size = 0x20000, scoped, tag = 'input window, operand 0']
    #allocation3 [shape = 's32[2]{0}', space=sflag, size = 0x8, scoped, tag = 'scoped memory for tpu_custom_call.1']
    #allocation4 [shape = 's32[2]{0}', space=sflag, size = 0x8, scoped, tag = 'scoped memory for tpu_custom_call.1']
    #allocation5 [shape = 'u8[1024]{0}', space=vmem, size = 0x400, scoped, tag = 'output window, operand 1']
    %8 = vsyncpa [#allocation3], 0
    %s9 = scalar_lea.sflag [#allocation3], 1
    %10 = vsyncpa %s9, 0
    %11 = vsyncpa [#allocation4], 0
    %s12 = scalar_lea.sflag [#allocation4], 1
    %13 = vsyncpa %s12, 0
    loop: start=0, step=1, limit=6
    $region2: #{tpu_custom_call.1} parent=1 // loop_pre_header
      _
    $region3: #{tpu_custom_call.1} parent=1 // loop_header
      %s15 = sphi 0, %s19
      %p16 = scmp.ge.s32.totalorder %s15, 6
      %s22 = sphi 0, %s34
      %s23 = sphi 0, %s30
      %s24 = sphi 0, %s22
      %s25 = sphi 0, %s23
      %s26 = sphi 0, %s24
      %s27 = sphi 0, %s25
      %s39 = sphi 0, %s41
      %s42 = sphi 0, %s39
      %s43 = sphi 0, %s42
      %s59 = sphi 0, %s43
      %s65 = sphi 0, %s67
      %s68 = sphi 0, %s65
      %s69 = sphi 0, %s68
      %s85 = sphi 0, %s69
      %s93 = sphi 0, %s95
      %s96 = sphi 0, %s93
      %s97 = sphi 0, %s96
      %s113 = sphi 0, %s97
    $region4: #{tpu_custom_call.1} parent=1 // loop_header_branch
      %18 = sbr.rel (%p16) target = $region8
    $region5: #{tpu_custom_call.1} parent=1 // loop_body
      %s20 = ssub.s32 %s15, 1
      %s21 = ssub.s32 %s15, 2
      %s28 = sadd.s32 1, %s23
      %p29 = scmp.ge.s32.totalorder %s28, 2
      %s30 = scalar_select %p29, 0, %s28
      %s31 = sadd.s32 1, %s22
      %s32 = scalar_select %p29, %s31, %s22
      %p33 = scmp.ge.s32.totalorder %s32, 2
      %s34 = scalar_select %p33, 0, %s32
      %s35 = ssub.s32 %s22, %s34
      %s36 = ssub.s32 %s23, %s30
      %s37 = sor.u32 %s35, %s36
      %p38 = scmp.eq.s32.totalorder %s37, 0
      %s40 = sadd.s32 %s39, 1
      %s41 = scalar_select %p38, %s39, %s40
      %p44 = pneg %p38
      %p45 = scmp.eq.s32.totalorder %s15, 3
      %p46 = por %p44, %p45
      %p47 = scmp.ne.s32.totalorder %s39, %s42
      %p48 = scmp.eq.s32.totalorder %s15, 0
      %p49 = por %p47, %p48
      %p50 = scmp.ne.s32.totalorder %s39, %s42
      %p51 = scmp.eq.s32.totalorder %s20, 3
      %p52 = por %p50, %p51
      %p53 = scmp.ne.s32.totalorder %s42, %s43
      %p54 = scmp.eq.s32.totalorder %s20, 0
      %p55 = por %p53, %p54
      %p56 = scmp.ne.s32.totalorder %s42, %s43
      %p57 = scmp.eq.s32.totalorder %s21, 3
      %p58 = por %p56, %p57
      %p60 = scmp.ne.s32.totalorder %s43, %s59
      %p61 = scmp.eq.s32.totalorder %s21, 0
      %p62 = por %p60, %p61
      %s63 = ssub.s32 %s22, %s34
      %p64 = scmp.eq.s32.totalorder %s63, 0
      %s66 = sadd.s32 %s65, 1
      %s67 = scalar_select %p64, %s65, %s66
      %p70 = pneg %p64
      %p71 = scmp.eq.s32.totalorder %s15, 3
      %p72 = por %p70, %p71
      %p73 = scmp.ne.s32.totalorder %s65, %s68
      %p74 = scmp.eq.s32.totalorder %s15, 0
      %p75 = por %p73, %p74
      %p76 = scmp.ne.s32.totalorder %s65, %s68
      %p77 = scmp.eq.s32.totalorder %s20, 3
      %p78 = por %p76, %p77
      %p79 = scmp.ne.s32.totalorder %s68, %s69
      %p80 = scmp.eq.s32.totalorder %s20, 0
      %p81 = por %p79, %p80
      %p82 = scmp.ne.s32.totalorder %s68, %s69
      %p83 = scmp.eq.s32.totalorder %s21, 3
      %p84 = por %p82, %p83
      %p86 = scmp.ne.s32.totalorder %s69, %s85
      %p87 = scmp.eq.s32.totalorder %s21, 0
      %p88 = por %p86, %p87
      %s89 = ssub.s32 %s22, %s34
      %s90 = ssub.s32 %s23, %s30
      %s91 = sor.u32 %s89, %s90
      %p92 = scmp.eq.s32.totalorder %s91, 0
      %s94 = sadd.s32 %s93, 1
      %s95 = scalar_select %p92, %s93, %s94
      %p98 = pneg %p92
      %p99 = scmp.eq.s32.totalorder %s15, 3
      %p100 = por %p98, %p99
      %p101 = scmp.ne.s32.totalorder %s93, %s96
      %p102 = scmp.eq.s32.totalorder %s15, 0
      %p103 = por %p101, %p102
      %p104 = scmp.ne.s32.totalorder %s93, %s96
      %p105 = scmp.eq.s32.totalorder %s20, 3
      %p106 = por %p104, %p105
      %p107 = scmp.ne.s32.totalorder %s96, %s97
      %p108 = scmp.eq.s32.totalorder %s20, 0
      %p109 = por %p107, %p108
      %p110 = scmp.ne.s32.totalorder %s96, %s97
      %p111 = scmp.eq.s32.totalorder %s21, 3
      %p112 = por %p110, %p111
      %p114 = scmp.ne.s32.totalorder %s97, %s113
      %p115 = scmp.eq.s32.totalorder %s21, 0
      %p116 = por %p114, %p115
      %p117 = scmp.le.s32.totalorder 1, %s15
      %p118 = scmp.lt.s32.totalorder %s15, 5
      %p119 = pnand %p117, %p118
      %p120 = pneg %p119
      // Predicated region
      $region9: #{tpu_custom_call.1} parent=5 // pred_check
        _
      $region10: #{tpu_custom_call.1} parent=5 // pred_check_branch
        %122 = sbr.rel (%p119) target = $region12
      $region11: #{tpu_custom_call.1} parent=5 // pred_region
        %s123 = ssub.s32 %s15, 1
      $region12: #{tpu_custom_call.1} parent=5 // pred_fallthru
        _
      %p124 = scmp.lt.s32.totalorder %s15, 4
      // Predicated region
      $region13: #{tpu_custom_call.1} parent=5 // pred_check
        %p125 = pneg %p124
      $region14: #{tpu_custom_call.1} parent=5 // pred_check_branch
        %127 = sbr.rel (%p125) target = $region16
      $region15: #{tpu_custom_call.1} parent=5 // pred_region
        // Predicated region
        $region17: #{tpu_custom_call.1} parent=15 // pred_check
          %p128 = pneg %p49
        $region18: #{tpu_custom_call.1} parent=15 // pred_check_branch
          %130 = sbr.rel (%p128) target = $region20
        $region19: #{tpu_custom_call.1} parent=15 // pred_region
          %s131 = sand.u32 %s39, 1
          %s132 = scalar_lea.sflag [#allocation3], %s131
          %s133 = sand.u32 %s39, 1
          %s134 = smul.addr %s133, 128
          %s135 = scalar_lea.vmem [#allocation2], %s134
          %s136 = smul.u32 16, %s22
          %138 = vsyncadd %s132, 0
          %s139 = smul.addr %s136, 2
          %s140 = sadd.s32 %s23, %s139
          %s141 = smul.addr %s140, 8
          %s142 = scalar_lea.hbm %s0, %s141
          %s143 = sshll.u32 %s142, 4
          %s144 = int_to_ptr.hbm [resolvable:$true] %s143
          %s145 = sshll.u32 %s135, 4
          %s146 = int_to_ptr.vmem [resolvable:$true] %s145
          %151 = dma.hbm_to_vmem [thread:$0]  %s144, 2048, %s146, %s132, 256, 128, 8
        $region20: #{tpu_custom_call.1} parent=15 // pred_fallthru
          _
      $region16: #{tpu_custom_call.1} parent=5 // pred_fallthru
        _
      %p152 = scmp.le.s32.totalorder 1, %s15
      %p153 = scmp.lt.s32.totalorder %s15, 5
      %p154 = pnand %p152, %p153
      %p155 = pneg %p154
      // Predicated region
      $region21: #{tpu_custom_call.1} parent=5 // pred_check
        _
      $region22: #{tpu_custom_call.1} parent=5 // pred_check_branch
        %157 = sbr.rel (%p154) target = $region24
      $region23: #{tpu_custom_call.1} parent=5 // pred_region
        %s158 = ssub.s32 %s15, 1
        %s159 = sand.u32 %s42, 1
        %s160 = scalar_lea.sflag [#allocation3], %s159
        %s161 = sand.u32 %s42, 1
        %s162 = smul.addr %s161, 128
        %s163 = scalar_lea.vmem [#allocation2], %s162
        // Predicated region
        $region25: #{tpu_custom_call.1} parent=23 // pred_check
          %p164 = pneg %p55
        $region26: #{tpu_custom_call.1} parent=23 // pred_check_branch
          %166 = sbr.rel (%p164) target = $region28
        $region27: #{tpu_custom_call.1} parent=23 // pred_region
          %168 = dma.done %s160, 2048
        $region28: #{tpu_custom_call.1} parent=23 // pred_fallthru
          _
        %s169 = sand.u32 %s42, 1
        %s170 = scalar_lea.sflag [#allocation3], %s169
        %s171 = sand.u32 %s42, 1
        %s172 = smul.addr %s171, 128
        %s173 = scalar_lea.vmem [#allocation2], %s172
        %p174 = pneg %p55
        %p175 = pneg %p52
        %p176 = pneg %p81
        %p177 = pneg %p78
        %s178 = smul.u32 16, %s24
        %p179 = scmp.lt.s32.totalorder %s178, 31
        %s180 = scalar_select %p179, %s178, 31
        %s181 = smul.addr %s180, 8
        %s182 = scalar_lea.vmem %s1, %s181
        %p183 = pneg %p109
        %p184 = pneg %p106
        %s185 = sand.u32 %s96, 1
        %s186 = scalar_lea.sflag [#allocation4], %s185
        %s187 = sand.u32 %s96, 1
        %s188 = scalar_lea.vmem [#allocation5], %s187
        %s189 = smul.u32 16, %s24
        %s190 = smul.u32 16, %s24
        %p191 = scmp.lt.s32.totalorder %s190, 31
        %s192 = scalar_select %p191, %s190, 31
        %s193 = smul.addr %s192, 8
        %s194 = scalar_lea.vmem %s1, %s193
        %s195 = smul.u32 16, %s24
        %p196 = scmp.eq.s32.totalorder %s25, 0
        // Predicated region
        $region29: #{tpu_custom_call.1} parent=23 // pred_check
          %p197 = pneg %p196
        $region30: #{tpu_custom_call.1} parent=23 // pred_check_branch
          %199 = sbr.rel (%p197) target = $region32
        $region31: #{tpu_custom_call.1} parent=23 // pred_region
          %vm200 = vcmask 7168
          %201 = vst.msk [vmem:[%s194] sm:$0xff] %vm200, 0.0
          %202 = vst.msk [vmem:[%s194 + $0x8] sm:$0xff] %vm200, 0.0
          %203 = vst.msk [vmem:[%s194 + $0x10] sm:$0xff] %vm200, 0.0
          %204 = vst.msk [vmem:[%s194 + $0x18] sm:$0xff] %vm200, 0.0
          %205 = vst.msk [vmem:[%s194 + $0x20] sm:$0xff] %vm200, 0.0
          %206 = vst.msk [vmem:[%s194 + $0x28] sm:$0xff] %vm200, 0.0
          %207 = vst.msk [vmem:[%s194 + $0x30] sm:$0xff] %vm200, 0.0
          %208 = vst.msk [vmem:[%s194 + $0x38] sm:$0xff] %vm200, 0.0
          %209 = vst.msk [vmem:[%s194 + $0x40] sm:$0xff] %vm200, 0.0
          %210 = vst.msk [vmem:[%s194 + $0x48] sm:$0xff] %vm200, 0.0
          %211 = vst.msk [vmem:[%s194 + $0x50] sm:$0xff] %vm200, 0.0
          %212 = vst.msk [vmem:[%s194 + $0x58] sm:$0xff] %vm200, 0.0
          %213 = vst.msk [vmem:[%s194 + $0x60] sm:$0xff] %vm200, 0.0
          %214 = vst.msk [vmem:[%s194 + $0x68] sm:$0xff] %vm200, 0.0
          %215 = vst.msk [vmem:[%s194 + $0x70] sm:$0xff] %vm200, 0.0
          %216 = vst.msk [vmem:[%s194 + $0x78] sm:$0xff] %vm200, 0.0
        $region32: #{tpu_custom_call.1} parent=23 // pred_fallthru
          _
        %v217 = vld [vmem:[%s163] sm:$0xff]
        %v218 = vld [vmem:[%s163 + $0x8] sm:$0xff]
        %v219 = vld [vmem:[%s163 + $0x10] sm:$0xff]
        %v220 = vld [vmem:[%s163 + $0x18] sm:$0xff]
        %v221 = vld [vmem:[%s163 + $0x20] sm:$0xff]
        %v222 = vld [vmem:[%s163 + $0x28] sm:$0xff]
        %v223 = vld [vmem:[%s163 + $0x30] sm:$0xff]
        %v224 = vld [vmem:[%s163 + $0x38] sm:$0xff]
        %v225 = vld [vmem:[%s163 + $0x40] sm:$0xff]
        %v226 = vld [vmem:[%s163 + $0x48] sm:$0xff]
        %v227 = vld [vmem:[%s163 + $0x50] sm:$0xff]
        %v228 = vld [vmem:[%s163 + $0x58] sm:$0xff]
        %v229 = vld [vmem:[%s163 + $0x60] sm:$0xff]
        %v230 = vld [vmem:[%s163 + $0x68] sm:$0xff]
        %v231 = vld [vmem:[%s163 + $0x70] sm:$0xff]
        %v232 = vld [vmem:[%s163 + $0x78] sm:$0xff]
        %vm233 = vcmp.gt.f32.partialorder %v217, 0.0
        %vm234 = vcmp.gt.f32.partialorder %v218, 0.0
        %vm235 = vcmp.gt.f32.partialorder %v219, 0.0
        %vm236 = vcmp.gt.f32.partialorder %v220, 0.0
        %vm237 = vcmp.gt.f32.partialorder %v221, 0.0
        %vm238 = vcmp.gt.f32.partialorder %v222, 0.0
        %vm239 = vcmp.gt.f32.partialorder %v223, 0.0
        %vm240 = vcmp.gt.f32.partialorder %v224, 0.0
        %vm241 = vcmp.gt.f32.partialorder %v225, 0.0
        %vm242 = vcmp.gt.f32.partialorder %v226, 0.0
        %vm243 = vcmp.gt.f32.partialorder %v227, 0.0
        %vm244 = vcmp.gt.f32.partialorder %v228, 0.0
        %vm245 = vcmp.gt.f32.partialorder %v229, 0.0
        %vm246 = vcmp.gt.f32.partialorder %v230, 0.0
        %vm247 = vcmp.gt.f32.partialorder %v231, 0.0
        %vm248 = vcmp.gt.f32.partialorder %v232, 0.0
        %v249 = vadd.f32 %v217, 1.0
        %v250 = vadd.f32 %v218, 1.0
        %v251 = vadd.f32 %v219, 1.0
        %v252 = vadd.f32 %v220, 1.0
        %v253 = vadd.f32 %v221, 1.0
        %v254 = vadd.f32 %v222, 1.0
        %v255 = vadd.f32 %v223, 1.0
        %v256 = vadd.f32 %v224, 1.0
        %v257 = vadd.f32 %v225, 1.0
        %v258 = vadd.f32 %v226, 1.0
        %v259 = vadd.f32 %v227, 1.0
        %v260 = vadd.f32 %v228, 1.0
        %v261 = vadd.f32 %v229, 1.0
        %v262 = vadd.f32 %v230, 1.0
        %v263 = vadd.f32 %v231, 1.0
        %v264 = vadd.f32 %v232, 1.0
        %v265 = vmin.f32 %v217, 0.0
        %v266 = vmin.f32 %v218, 0.0
        %v267 = vmin.f32 %v219, 0.0
        %v268 = vmin.f32 %v220, 0.0
        %v269 = vmin.f32 %v221, 0.0
        %v270 = vmin.f32 %v222, 0.0
        %v271 = vmin.f32 %v223, 0.0
        %v272 = vmin.f32 %v224, 0.0
        %v273 = vmin.f32 %v225, 0.0
        %v274 = vmin.f32 %v226, 0.0
        %v275 = vmin.f32 %v227, 0.0
        %v276 = vmin.f32 %v228, 0.0
        %v277 = vmin.f32 %v229, 0.0
        %v278 = vmin.f32 %v230, 0.0
        %v279 = vmin.f32 %v231, 0.0
        %v280 = vmin.f32 %v232, 0.0
        %v281 = vmul.f32 %v265, 1.442695
        %v282 = vpow.pop %v281
        %v283 = vmul.f32 %v266, 1.442695
        %v284 = vpow.pop %v283
        %v285 = vmul.f32 %v267, 1.442695
        %v286 = vpow.pop %v285
        %v287 = vmul.f32 %v268, 1.442695
        %v288 = vpow.pop %v287
        %v289 = vmul.f32 %v269, 1.442695
        %v290 = vpow.pop %v289
        %v291 = vmul.f32 %v270, 1.442695
        %v292 = vpow.pop %v291
        %v293 = vmul.f32 %v271, 1.442695
        %v294 = vpow.pop %v293
        %v295 = vmul.f32 %v272, 1.442695
        %v296 = vpow.pop %v295
        %v297 = vmul.f32 %v273, 1.442695
        %v298 = vpow.pop %v297
        %v299 = vmul.f32 %v274, 1.442695
        %v300 = vpow.pop %v299
        %v301 = vmul.f32 %v275, 1.442695
        %v302 = vpow.pop %v301
        %v303 = vmul.f32 %v276, 1.442695
        %v304 = vpow.pop %v303
        %v305 = vmul.f32 %v277, 1.442695
        %v306 = vpow.pop %v305
        %v307 = vmul.f32 %v278, 1.442695
        %v308 = vpow.pop %v307
        %v309 = vmul.f32 %v279, 1.442695
        %v310 = vpow.pop %v309
        %v311 = vmul.f32 %v280, 1.442695
        %v312 = vpow.pop %v311
        %v313 = vsel %vm233, %v249, %v282
        %v314 = vsel %vm234, %v250, %v284
        %v315 = vsel %vm235, %v251, %v286
        %v316 = vsel %vm236, %v252, %v288
        %v317 = vsel %vm237, %v253, %v290
        %v318 = vsel %vm238, %v254, %v292
        %v319 = vsel %vm239, %v255, %v294
        %v320 = vsel %vm240, %v256, %v296
        %v321 = vsel %vm241, %v257, %v298
        %v322 = vsel %vm242, %v258, %v300
        %v323 = vsel %vm243, %v259, %v302
        %v324 = vsel %vm244, %v260, %v304
        %v325 = vsel %vm245, %v261, %v306
        %v326 = vsel %vm246, %v262, %v308
        %v327 = vsel %vm247, %v263, %v310
        %v328 = vsel %vm248, %v264, %v312
        %v329 = vld [vmem:[%s194] sm:$0xff]
        %v330 = vld [vmem:[%s194 + $0x8] sm:$0xff]
        %v331 = vld [vmem:[%s194 + $0x10] sm:$0xff]
        %v332 = vld [vmem:[%s194 + $0x18] sm:$0xff]
        %v333 = vld [vmem:[%s194 + $0x20] sm:$0xff]
        %v334 = vld [vmem:[%s194 + $0x28] sm:$0xff]
        %v335 = vld [vmem:[%s194 + $0x30] sm:$0xff]
        %v336 = vld [vmem:[%s194 + $0x38] sm:$0xff]
        %v337 = vld [vmem:[%s194 + $0x40] sm:$0xff]
        %v338 = vld [vmem:[%s194 + $0x48] sm:$0xff]
        %v339 = vld [vmem:[%s194 + $0x50] sm:$0xff]
        %v340 = vld [vmem:[%s194 + $0x58] sm:$0xff]
        %v341 = vld [vmem:[%s194 + $0x60] sm:$0xff]
        %v342 = vld [vmem:[%s194 + $0x68] sm:$0xff]
        %v343 = vld [vmem:[%s194 + $0x70] sm:$0xff]
        %v344 = vld [vmem:[%s194 + $0x78] sm:$0xff]
        %345 = vadd.xlane.f32.xlu0 %v313
        %v346 = vpop.xlane.xlu0 %345
        %347 = vadd.xlane.f32.xlu0 %v314
        %v348 = vpop.xlane.xlu0 %347
        %349 = vadd.xlane.f32.xlu0 %v315
        %v350 = vpop.xlane.xlu0 %349
        %351 = vadd.xlane.f32.xlu0 %v316
        %v352 = vpop.xlane.xlu0 %351
        %353 = vadd.xlane.f32.xlu0 %v317
        %v354 = vpop.xlane.xlu0 %353
        %355 = vadd.xlane.f32.xlu0 %v318
        %v356 = vpop.xlane.xlu0 %355
        %357 = vadd.xlane.f32.xlu0 %v319
        %v358 = vpop.xlane.xlu0 %357
        %359 = vadd.xlane.f32.xlu0 %v320
        %v360 = vpop.xlane.xlu0 %359
        %361 = vadd.xlane.f32.xlu0 %v321
        %v362 = vpop.xlane.xlu0 %361
        %363 = vadd.xlane.f32.xlu0 %v322
        %v364 = vpop.xlane.xlu0 %363
        %365 = vadd.xlane.f32.xlu0 %v323
        %v366 = vpop.xlane.xlu0 %365
        %367 = vadd.xlane.f32.xlu0 %v324
        %v368 = vpop.xlane.xlu0 %367
        %369 = vadd.xlane.f32.xlu0 %v325
        %v370 = vpop.xlane.xlu0 %369
        %371 = vadd.xlane.f32.xlu0 %v326
        %v372 = vpop.xlane.xlu0 %371
        %373 = vadd.xlane.f32.xlu0 %v327
        %v374 = vpop.xlane.xlu0 %373
        %375 = vadd.xlane.f32.xlu0 %v328
        %v376 = vpop.xlane.xlu0 %375
        %v377 = vadd.f32 %v329, %v346
        %v378 = vadd.f32 %v330, %v348
        %v379 = vadd.f32 %v331, %v350
        %v380 = vadd.f32 %v332, %v352
        %v381 = vadd.f32 %v333, %v354
        %v382 = vadd.f32 %v334, %v356
        %v383 = vadd.f32 %v335, %v358
        %v384 = vadd.f32 %v336, %v360
        %v385 = vadd.f32 %v337, %v362
        %v386 = vadd.f32 %v338, %v364
        %v387 = vadd.f32 %v339, %v366
        %v388 = vadd.f32 %v340, %v368
        %v389 = vadd.f32 %v341, %v370
        %v390 = vadd.f32 %v342, %v372
        %v391 = vadd.f32 %v343, %v374
        %v392 = vadd.f32 %v344, %v376
        %vm393 = vcmask 7168
        %394 = vst.msk [vmem:[%s194] sm:$0xff] %vm393, %v377
        %395 = vst.msk [vmem:[%s194 + $0x8] sm:$0xff] %vm393, %v378
        %396 = vst.msk [vmem:[%s194 + $0x10] sm:$0xff] %vm393, %v379
        %397 = vst.msk [vmem:[%s194 + $0x18] sm:$0xff] %vm393, %v380
        %398 = vst.msk [vmem:[%s194 + $0x20] sm:$0xff] %vm393, %v381
        %399 = vst.msk [vmem:[%s194 + $0x28] sm:$0xff] %vm393, %v382
        %400 = vst.msk [vmem:[%s194 + $0x30] sm:$0xff] %vm393, %v383
        %401 = vst.msk [vmem:[%s194 + $0x38] sm:$0xff] %vm393, %v384
        %402 = vst.msk [vmem:[%s194 + $0x40] sm:$0xff] %vm393, %v385
        %403 = vst.msk [vmem:[%s194 + $0x48] sm:$0xff] %vm393, %v386
        %404 = vst.msk [vmem:[%s194 + $0x50] sm:$0xff] %vm393, %v387
        %405 = vst.msk [vmem:[%s194 + $0x58] sm:$0xff] %vm393, %v388
        %406 = vst.msk [vmem:[%s194 + $0x60] sm:$0xff] %vm393, %v389
        %407 = vst.msk [vmem:[%s194 + $0x68] sm:$0xff] %vm393, %v390
        %408 = vst.msk [vmem:[%s194 + $0x70] sm:$0xff] %vm393, %v391
        %409 = vst.msk [vmem:[%s194 + $0x78] sm:$0xff] %vm393, %v392
        %v410 = vadd.f32 %v313, %v314
        %v411 = vadd.f32 %v410, %v315
        %v412 = vadd.f32 %v411, %v316
        %v413 = vadd.f32 %v412, %v317
        %v414 = vadd.f32 %v413, %v318
        %v415 = vadd.f32 %v414, %v319
        %v416 = vadd.f32 %v415, %v320
        %v417 = vadd.f32 %v416, %v321
        %v418 = vadd.f32 %v417, %v322
        %v419 = vadd.f32 %v418, %v323
        %v420 = vadd.f32 %v419, %v324
        %v421 = vadd.f32 %v420, %v325
        %v422 = vadd.f32 %v421, %v326
        %v423 = vadd.f32 %v422, %v327
        %v424 = vadd.f32 %v423, %v328
        %v425 = vrot.slane %v424, 4
        %v426 = vadd.f32 %v424, %v425
        %v427 = vrot.slane %v426, 2
        %v428 = vadd.f32 %v426, %v427
        %v429 = vrot.slane %v428, 1
        %v430 = vadd.f32 %v428, %v429
        %431 = vst [vmem:[%s188] sm:$0x1] %v430
        %s432 = smul.u32 16, %s24
        %p433 = scmp.lt.s32.totalorder %s432, 31
        %s434 = scalar_select %p433, %s432, 31
        %s435 = smul.addr %s434, 8
        %s436 = scalar_lea.vmem %s1, %s435
        %s437 = sand.u32 %s96, 1
        %s438 = scalar_lea.sflag [#allocation4], %s437
        %s439 = sand.u32 %s96, 1
        %s440 = scalar_lea.vmem [#allocation5], %s439
        // Predicated region
        $region33: #{tpu_custom_call.1} parent=23 // pred_check
          %p441 = pneg %p78
        $region34: #{tpu_custom_call.1} parent=23 // pred_check_branch
          %443 = sbr.rel (%p441) target = $region36
        $region35: #{tpu_custom_call.1} parent=23 // pred_region
          %s444 = smul.u32 16, %s24
        $region36: #{tpu_custom_call.1} parent=23 // pred_fallthru
          _
        // Predicated region
        $region37: #{tpu_custom_call.1} parent=23 // pred_check
          %p445 = pneg %p106
        $region38: #{tpu_custom_call.1} parent=23 // pred_check_branch
          %447 = sbr.rel (%p445) target = $region40
        $region39: #{tpu_custom_call.1} parent=23 // pred_region
          %449 = vsyncadd %s438, 0
          %s450 = smul.addr %s24, 2
          %s451 = sadd.s32 %s25, %s450
          %s452 = scalar_lea.hbm %s2, %s451
          %s454 = sshll.u32 %s440, 4
          %s455 = int_to_ptr.vmem [resolvable:$true] %s454
          %s456 = sshll.u32 %s452, 4
          %s457 = int_to_ptr.hbm [resolvable:$true] %s456
          %459 = dma.vmem_to_hbm [thread:$0]  %s455, 16, %s457, %s438
        $region40: #{tpu_custom_call.1} parent=23 // pred_fallthru
          _
      $region24: #{tpu_custom_call.1} parent=5 // pred_fallthru
        _
      %p460 = scmp.le.s32.totalorder 2, %s15
      // Predicated region
      $region41: #{tpu_custom_call.1} parent=5 // pred_check
        %p461 = pneg %p460
      $region42: #{tpu_custom_call.1} parent=5 // pred_check_branch
        %463 = sbr.rel (%p461) target = $region44
      $region43: #{tpu_custom_call.1} parent=5 // pred_region
        %s464 = ssub.s32 %s15, 2
        // Predicated region
        $region45: #{tpu_custom_call.1} parent=43 // pred_check
          %p465 = pneg %p84
        $region46: #{tpu_custom_call.1} parent=43 // pred_check_branch
          %467 = sbr.rel (%p465) target = $region48
        $region47: #{tpu_custom_call.1} parent=43 // pred_region
          %s468 = smul.u32 16, %s26
          %p469 = scmp.lt.s32.totalorder %s468, 31
          %s470 = scalar_select %p469, %s468, 31
          %s471 = smul.addr %s470, 8
          %s472 = scalar_lea.vmem %s1, %s471
        $region48: #{tpu_custom_call.1} parent=43 // pred_fallthru
          _
        // Predicated region
        $region49: #{tpu_custom_call.1} parent=43 // pred_check
          %p473 = pneg %p112
        $region50: #{tpu_custom_call.1} parent=43 // pred_check_branch
          %475 = sbr.rel (%p473) target = $region52
        $region51: #{tpu_custom_call.1} parent=43 // pred_region
          %s476 = sand.u32 %s97, 1
          %s477 = scalar_lea.sflag [#allocation4], %s476
          %s478 = sand.u32 %s97, 1
          %s479 = scalar_lea.vmem [#allocation5], %s478
          %481 = dma.done %s477, 16
        $region52: #{tpu_custom_call.1} parent=43 // pred_fallthru
          _
      $region44: #{tpu_custom_call.1} parent=5 // pred_fallthru
        _
    $region6: #{tpu_custom_call.1} parent=1 // loop_footer
      %s19 = sadd.s32 1, %s15
    $region7: #{tpu_custom_call.1} parent=1 // loop_footer_branch
      %14 = sbr.rel target = $region3
    $region8: #{tpu_custom_call.1} parent=1 // loop_exit
      _
    %482 = vsyncpa [#allocation3], 1
    %s483 = scalar_lea.sflag [#allocation3], 1
    %484 = vsyncpa %s483, 1
    %485 = vsyncpa [#allocation4], 1
    %s486 = scalar_lea.sflag [#allocation4], 1
    %487 = vsyncpa %s486, 1

</llo_original>
